<compile_context>
chip_gen: v7x
topology: tpu7x:2x2x1
jax: 0.10.0
libtpu: 0.0.40
codegen_flags: <defaults>
</compile_context>

<pallas_src>
import functools
from dataclasses import dataclass

import jax
import jax.numpy as jnp
from jax.experimental import pallas as pl
from jax.experimental.pallas import tpu as pltpu

LANE = 128


@dataclass
class MCfg:
    density: float = 0.20022
    weight: float = 1.0


def _cdiv(a, b):
    return -(-a // b)


def _round_up(a, b):
    return _cdiv(a, b) * b


# ----------------------------------------------------------------------------
# Kernel 1 (precompute only): per-face lumped-mass contribution
#           density * triangle_area / 3
# ----------------------------------------------------------------------------
def _face_mass_kernel(uw_ref, fm_ref, *, density):
    # uw_ref: (6, tile_f) packed edge vectors; rows 0..2 = v2-v0, rows 3..5 = v1-v0
    u = uw_ref[0:3, :]
    w = uw_ref[3:6, :]
    cx = u[1:2, :] * w[2:3, :] - u[2:3, :] * w[1:2, :]
    cy = u[2:3, :] * w[0:1, :] - u[0:1, :] * w[2:3, :]
    cz = u[0:1, :] * w[1:2, :] - u[1:2, :] * w[0:1, :]
    area = 0.5 * jnp.sqrt(cx * cx + cy * cy + cz * cz)        # (1, tile_f)
    fm_ref[...] = (density / 3.0) * area


def compute_face_masses(rest_pos, faces, density, tile_f=512):
    """rest_pos: (N,3) f32, faces: (F,3) i32 -> per-face mass/3 contribution (F,)."""
    F = faces.shape[0]
    # Data-dependent gather of triangle vertices is JAX glue (precompute-only path).
    v0 = rest_pos[faces[:, 0]]
    v1 = rest_pos[faces[:, 1]]
    v2 = rest_pos[faces[:, 2]]
    uw = jnp.concatenate([(v2 - v0).T, (v1 - v0).T], axis=0).astype(jnp.float32)

    F_pad = _round_up(F, tile_f)
    if F_pad != F:
        uw = jnp.pad(uw, ((0, 0), (0, F_pad - F)))

    fm = pl.pallas_call(
        functools.partial(_face_mass_kernel, density=density),
        out_shape=jax.ShapeDtypeStruct((1, F_pad), jnp.float32),
        grid=(F_pad // tile_f,),
        in_specs=[pl.BlockSpec((6, tile_f), lambda i: (0, i))],
        out_specs=pl.BlockSpec((1, tile_f), lambda i: (0, i)),
        compiler_params=pltpu.CompilerParams(dimension_semantics=("parallel",)),
    )(uw)
    return fm[0, :F]


# ----------------------------------------------------------------------------
# Kernel 2 (hot path): inertia loss reduction over flat lane-dense tiles
# ----------------------------------------------------------------------------
def _inertia_kernel(pred_ref, pos_ref, vel_ref, w_ref, out_ref, acc_ref):
    i = pl.program_id(1)

    @pl.when(i == 0)
    def _():
        acc_ref[...] = jnp.zeros_like(acc_ref)

    # (tile_rows, 128) pure-VPU tile: d^2 * fused-weight.
    d = pred_ref[...] - (pos_ref[...] + vel_ref[...])
    contrib = d * d * w_ref[...]
    # Partial-reduce into a single-vreg (8,128) accumulator: reshape groups
    # sublane-aligned row blocks, sum over the leading axis is plain vreg adds.
    acc_ref[...] += contrib.reshape(-1, 8, LANE).sum(axis=0)

    @pl.when(i == pl.num_programs(1) - 1)
    def _():
        # Single cross-lane reduce + (1,1) store at the end of this core's range.
        out_ref[...] = jnp.sum(acc_ref[...]).reshape(1, 1)


def _choose_tiling(rows, num_splits, max_tile_rows):
    """Pick (num_splits, tile_rows, inner, rows_pad) with >=2 steps/split and
    minimal padding waste; tile_rows capped for v7x VMEM headroom."""
    num_splits = max(1, min(num_splits, rows // 16))   # each split >= 2 min tiles
    per_split = _cdiv(rows, num_splits)
    tile_rows = (per_split // 2) // 8 * 8               # leave >= 2 steps per split
    tile_rows = max(8, min(max_tile_rows, tile_rows))
    inner = _cdiv(per_split, tile_rows)
    # Shrink the tile so rows_pad hugs the real row count (pad waste < 8 rows/split).
    tile_rows = min(tile_rows, _round_up(_cdiv(per_split, inner), 8))
    inner = _cdiv(per_split, tile_rows)
    rows_pad = num_splits * inner * tile_rows
    return num_splits, tile_rows, inner, rows_pad


class InertiaCriterion:
    """Pallas inertia criterion.

    __init__ precomputes everything that is static across a simulation
    (vertex mass from rest geometry, cutout mask, timestep/batch/weight scale)
    into one pre-padded, tile-shaped weight stream, and builds the pallas_call.
    __call__(pred_pos, pos, velocity) is the per-step hot path.
    """

    name = "inertia"

    def __init__(self, mcfg, rest_pos, faces, ts, num_graphs, cutout_mask=None,
                 tile_rows=2048, num_splits=2, tile_f=512):
        self.mcfg = mcfg
        self.weight = float(mcfg.weight)
        N = rest_pos.shape[0]

        # ---- static precompute (hoisted out of the per-step path) ----
        face_mass = compute_face_masses(rest_pos, faces, mcfg.density, tile_f)
        # TODO(synk): per-face -> per-vertex scatter-add is data-dependent; no clean
        # rectangular-tile Pallas expression, kept as JAX glue (runs once).
        vertex_mass = (jnp.zeros((N,), jnp.float32)
                       .at[faces[:, 0]].add(face_mass)
                       .at[faces[:, 1]].add(face_mass)
                       .at[faces[:, 2]].add(face_mass))

        scale = jnp.asarray(self.weight, jnp.float32) / (
            jnp.asarray(num_graphs, jnp.float32) * 2.0
            * jnp.asarray(ts, jnp.float32) ** 2)
        w_vert = vertex_mass * scale
        if cutout_mask is not None:
            w_vert = w_vert * cutout_mask.astype(jnp.float32)
        w_elem = jnp.repeat(w_vert, 3)                     # (3N,), matches (N,3) flatten

        L = 3 * N
        rows = _cdiv(L, LANE)
        (self._num_splits, self._tile_rows,
         self._inner, self._rows_pad) = _choose_tiling(rows, num_splits, tile_rows)
        self._L_pad = self._rows_pad * LANE
        self.padded_numel = self._L_pad                    # sims may pre-pad to this

        if self._L_pad != L:                               # zero weight => zero contribution
            w_elem = jnp.concatenate(
                [w_elem, jnp.zeros((self._L_pad - L,), jnp.float32)])
        self._w_tiles = jax.device_put(w_elem.reshape(self._rows_pad, LANE))

        # ---- build the reduction kernel once ----
        inner = self._inner
        in_map = lambda c, i, _inner=inner: (c * _inner + i, 0)
        self._reduce = pl.pallas_call(
            _inertia_kernel,
            out_shape=jax.ShapeDtypeStruct((self._num_splits, 1), jnp.float32),
            grid=(self._num_splits, inner),
            in_specs=[pl.BlockSpec((self._tile_rows, LANE), in_map)] * 4,
            out_specs=pl.BlockSpec((1, 1), lambda c, i: (c, 0)),
            scratch_shapes=[pltpu.VMEM((8, LANE), jnp.float32)],
            compiler_params=pltpu.CompilerParams(
                dimension_semantics=("parallel", "arbitrary")),
            cost_estimate=pl.CostEstimate(
                flops=5 * self._L_pad,
                transcendentals=0,
                bytes_accessed=4 * 4 * self._L_pad + 4 * self._num_splits),
        )

    def _as_tiles(self, a):
        flat = a.reshape(-1).astype(jnp.float32)
        n = flat.shape[0]
        if n == self._L_pad:
            # Free bitcast: no HBM copy when the caller's buffer is already aligned.
            return flat.reshape(self._rows_pad, LANE)
        # Fallback (one copy per stream). Hot sim loops should keep persistent
        # buffers of self.padded_numel elements instead.
        return jnp.concatenate(
            [flat, jnp.zeros((self._L_pad - n,), jnp.float32)]
        ).reshape(self._rows_pad, LANE)

    def __call__(self, pred_pos, pos, velocity):
        partials = self._reduce(self._as_tiles(pred_pos),
                                self._as_tiles(pos),
                                self._as_tiles(velocity),
                                self._w_tiles)
        return dict(loss=jnp.sum(partials), weight=self.weight)


# ----------------------------------------------------------------------------
# Pure-JAX reference (matches the PyTorch module)
# ----------------------------------------------------------------------------
def reference_loss(pred_pos, pos, velocity, rest_pos, faces, ts, B, density,
                   weight, cutout_mask):
    v0 = rest_pos[faces[:, 0]]
    v1 = rest_pos[faces[:, 1]]
    v2 = rest_pos[faces[:, 2]]
    area = 0.5 * jnp.linalg.norm(jnp.cross(v2 - v0, v1 - v0), axis=-1)
    fm = density * area / 3.0
    N = pos.shape[0]
    mass = (jnp.zeros((N,), jnp.float32)
            .at[faces[:, 0]].add(fm)
            .at[faces[:, 1]].add(fm)
            .at[faces[:, 2]].add(fm))
    x_hat = pos + velocity
    x_diff = pred_pos - x_hat
    num = (x_diff * mass[:, None] * x_diff).sum(-1)[:, None]
    loss = num / (2.0 * ts ** 2)
    if cutout_mask is not None:
        loss = jnp.where(cutout_mask[:, None], loss, 0.0)
    return loss.sum() / B * weight


if __name__ == "__main__":
    key = jax.random.PRNGKey(0)
    mcfg = MCfg(density=0.20022, weight=1.0)

    # Two identical cloth patches (PyG-style batch): 16 x 32 vertex grid each.
    # N = 1024 vertices -> 3N = 3072 elements = 24 lane-rows, so the hot-path
    # loss call takes the zero-copy (no padding) path with a 3-step pipeline.
    gw, gh = 16, 32
    n_per = gw * gh
    B = 2

    xs = jnp.arange(gw, dtype=jnp.float32) * 0.1
    ys = jnp.arange(gh, dtype=jnp.float32) * 0.1
    gx, gy = jnp.meshgrid(xs, ys, indexing="xy")              # (gh, gw)
    rest_single = jnp.stack(
        [gx.reshape(-1), gy.reshape(-1), jnp.zeros(n_per, jnp.float32)], axis=-1)

    faces_single = []
    for r in range(gh - 1):
        for c in range(gw - 1):
            v = r * gw + c
            faces_single.append((v, v + 1, v + gw))
            faces_single.append((v + 1, v + gw + 1, v + gw))
    faces_single = jnp.asarray(faces_single, jnp.int32)

    rest_pos = jnp.concatenate([rest_single, rest_single], axis=0)         # (1024, 3)
    faces = jnp.concatenate([faces_single, faces_single + n_per], axis=0)  # (1860, 3)
    N = rest_pos.shape[0]

    k1, k2, k3 = jax.random.split(key, 3)
    pos = rest_pos + 0.01 * jax.random.normal(k1, rest_pos.shape, jnp.float32)
    velocity = 0.05 * jax.random.normal(k2, rest_pos.shape, jnp.float32)
    pred_pos = pos + velocity + 0.01 * jax.random.normal(k3, rest_pos.shape, jnp.float32)

    timestep = jnp.full((B,), 1.0 / 30.0, jnp.float32)
    ts = timestep[0]

    # optional cutout mask: drop the first 8 vertices of each graph
    cutout_mask = (jnp.ones((N,), bool)
                   .at[:8].set(False)
                   .at[n_per:n_per + 8].set(False))

    # ---- static precompute (face-mass kernel + fused weight stream), once ----
    criterion = InertiaCriterion(mcfg, rest_pos, faces, ts, B,
                                 cutout_mask=cutout_mask)

    # ---- per-step hot path ----
    step_loss = jax.jit(lambda p, x, v: criterion(p, x, v)["loss"])
    loss = jax.block_until_ready(step_loss(pred_pos, pos, velocity))

    ref = reference_loss(pred_pos, pos, velocity, rest_pos, faces, ts, B,
                         mcfg.density, mcfg.weight, cutout_mask)
    ref = jax.block_until_ready(ref)

    assert abs(float(loss) - float(ref)) <= 1e-4 * max(1.0, abs(float(ref))), \
        (float(loss), float(ref))
    print("KERNEL_OK")
</pallas_src>

<mosaic_0001>
module attributes {stable_mosaic.version = 11 : i64} {
  func.func @_face_mass_kernel(%arg0: i32, %arg1: memref<6x512xf32, #tpu.memory_space<vmem>>, %arg2: memref<1x512xf32, #tpu.memory_space<vmem>>) attributes {dimension_semantics = [#tpu.dimension_semantics<parallel>], iteration_bounds = array<i64: 4>, scalar_prefetch = 0 : i64, scratch_operands = 0 : i64, tpu.core_type = #tpu.core_type<tc>, window_params = [{transform_indices = @transform_0, window_bounds = array<i64: 6, 512>}, {transform_indices = @transform_1, window_bounds = array<i64: 1, 512>}]} {
    %c0 = arith.constant 0 : index
    %c0_0 = arith.constant 0 : index
    %0 = vector.load %arg1[%c0, %c0_0] : memref<6x512xf32, #tpu.memory_space<vmem>>, vector<3x512xf32>
    %c3 = arith.constant 3 : index
    %c0_1 = arith.constant 0 : index
    %1 = vector.load %arg1[%c3, %c0_1] : memref<6x512xf32, #tpu.memory_space<vmem>>, vector<3x512xf32>
    %2 = vector.extract_strided_slice %0 {offsets = [1, 0], sizes = [1, 512], strides = [1, 1]} : vector<3x512xf32> to vector<1x512xf32>
    %3 = vector.extract_strided_slice %1 {offsets = [2, 0], sizes = [1, 512], strides = [1, 1]} : vector<3x512xf32> to vector<1x512xf32>
    %4 = arith.mulf %2, %3 : vector<1x512xf32>
    %5 = vector.extract_strided_slice %0 {offsets = [2, 0], sizes = [1, 512], strides = [1, 1]} : vector<3x512xf32> to vector<1x512xf32>
    %6 = vector.extract_strided_slice %1 {offsets = [1, 0], sizes = [1, 512], strides = [1, 1]} : vector<3x512xf32> to vector<1x512xf32>
    %7 = arith.mulf %5, %6 : vector<1x512xf32>
    %8 = arith.subf %4, %7 : vector<1x512xf32>
    %9 = vector.extract_strided_slice %0 {offsets = [2, 0], sizes = [1, 512], strides = [1, 1]} : vector<3x512xf32> to vector<1x512xf32>
    %10 = vector.extract_strided_slice %1 {offsets = [0, 0], sizes = [1, 512], strides = [1, 1]} : vector<3x512xf32> to vector<1x512xf32>
    %11 = arith.mulf %9, %10 : vector<1x512xf32>
    %12 = vector.extract_strided_slice %0 {offsets = [0, 0], sizes = [1, 512], strides = [1, 1]} : vector<3x512xf32> to vector<1x512xf32>
    %13 = vector.extract_strided_slice %1 {offsets = [2, 0], sizes = [1, 512], strides = [1, 1]} : vector<3x512xf32> to vector<1x512xf32>
    %14 = arith.mulf %12, %13 : vector<1x512xf32>
    %15 = arith.subf %11, %14 : vector<1x512xf32>
    %16 = vector.extract_strided_slice %0 {offsets = [0, 0], sizes = [1, 512], strides = [1, 1]} : vector<3x512xf32> to vector<1x512xf32>
    %17 = vector.extract_strided_slice %1 {offsets = [1, 0], sizes = [1, 512], strides = [1, 1]} : vector<3x512xf32> to vector<1x512xf32>
    %18 = arith.mulf %16, %17 : vector<1x512xf32>
    %19 = vector.extract_strided_slice %0 {offsets = [1, 0], sizes = [1, 512], strides = [1, 1]} : vector<3x512xf32> to vector<1x512xf32>
    %20 = vector.extract_strided_slice %1 {offsets = [0, 0], sizes = [1, 512], strides = [1, 1]} : vector<3x512xf32> to vector<1x512xf32>
    %21 = arith.mulf %19, %20 : vector<1x512xf32>
    %22 = arith.subf %18, %21 : vector<1x512xf32>
    %23 = arith.mulf %8, %8 : vector<1x512xf32>
    %24 = arith.mulf %15, %15 : vector<1x512xf32>
    %25 = arith.addf %23, %24 : vector<1x512xf32>
    %26 = arith.mulf %22, %22 : vector<1x512xf32>
    %27 = arith.addf %25, %26 : vector<1x512xf32>
    %28 = math.sqrt %27 : vector<1x512xf32>
    %cst = arith.constant 5.000000e-01 : f32
    %29 = vector.broadcast %cst : f32 to vector<1x512xf32>
    %30 = arith.mulf %29, %28 : vector<1x512xf32>
    %cst_2 = arith.constant 6.674000e-02 : f32
    %31 = vector.broadcast %cst_2 : f32 to vector<1x512xf32>
    %32 = arith.mulf %31, %30 : vector<1x512xf32>
    %c0_3 = arith.constant 0 : index
    %c0_4 = arith.constant 0 : index
    %33 = vector.load %arg2[%c0_3, %c0_4] : memref<1x512xf32, #tpu.memory_space<vmem>>, vector<1x512xf32>
    tpu.vector_store %arg2[%c0_3, %c0_4], %32 {strides = array<i32>} : memref<1x512xf32, #tpu.memory_space<vmem>>, vector<1x512xf32>,
    return
  }
  func.func @transform_0(%arg0: i32) -> (i32, i32) {
    %c0_i32 = arith.constant 0 : i32
    %c0_i32_0 = arith.constant 0 : i32
    return %c0_i32, %arg0 : i32, i32
  }
  func.func @transform_1(%arg0: i32) -> (i32, i32) {
    %c0_i32 = arith.constant 0 : i32
    %c0_i32_0 = arith.constant 0 : i32
    return %c0_i32, %arg0 : i32, i32
  }
}

</mosaic_0001>

<llo_original>
// kernel: tpu_custom_call.1
$region0: #{tpu_custom_call.1}
  #allocation0 [shape = 'u32[]', space=smem, size = 0x4, offset = 0x4, fixed_abs, tag = 'smem constant byte address 0x4 - core index']
  #allocation1 [shape = 'u32[144,128]{1,0:T(1,128)}', space=vmem, size = 0x12000, scoped, tag = 'internal scratch']
  %s0 = inlined_call_operand.hbm [shape: f32[6,2048], index: 0, kind: input, shape index: {}]
  %s1 = inlined_call_operand.hbm [shape: f32[1,2048], index: 1, kind: output, shape index: {}]
  %s2 = sld [smem:[#allocation0]]
  $region41: #{tpu_custom_call.1} parent=0
    _
  %s4 = ssub.s32 1, %s2
  %s5 = scalar_select 0, %s4, %s2
  $region1: #{tpu_custom_call.1} parent=0
    #allocation2 [shape = 'u8[32768]{0}', space=vmem, size = 0x8000, scoped, tag = 'input window, operand 0']
    #allocation3 [shape = 's32[2]{0}', space=sflag, size = 0x8, scoped, tag = 'scoped memory for tpu_custom_call.1']
    #allocation4 [shape = 's32[2]{0}', space=sflag, size = 0x8, scoped, tag = 'scoped memory for tpu_custom_call.1']
    #allocation5 [shape = 'u8[4096]{0}', space=vmem, size = 0x1000, scoped, tag = 'output window, operand 0']
    %6 = vsyncpa [#allocation3], 0
    %s7 = scalar_lea.sflag [#allocation3], 1
    %8 = vsyncpa %s7, 0
    %9 = vsyncpa [#allocation4], 0
    %s10 = scalar_lea.sflag [#allocation4], 1
    %11 = vsyncpa %s10, 0
    loop: start=0, step=1, limit=6
    $region2: #{tpu_custom_call.1} parent=1 // loop_pre_header
      _
    $region3: #{tpu_custom_call.1} parent=1 // loop_header
      %s13 = sphi 0, %s17
      %p14 = scmp.ge.s32.totalorder %s13, 6
      %s23 = sphi 0, %s25
      %s26 = sphi 0, %s23
      %s27 = sphi 0, %s26
      %s43 = sphi 0, %s27
      %s49 = sphi 0, %s51
      %s52 = sphi 0, %s49
      %s53 = sphi 0, %s52
      %s69 = sphi 0, %s53
    $region4: #{tpu_custom_call.1} parent=1 // loop_header_branch
      %16 = sbr.rel (%p14) target = $region8
    $region5: #{tpu_custom_call.1} parent=1 // loop_body
      %s18 = ssub.s32 %s13, 1
      %s19 = ssub.s32 %s13, 2
      %s20 = sadd.s32 %s13, 1
      %s21 = ssub.s32 %s13, %s20
      %p22 = scmp.eq.s32.totalorder %s21, 0
      %s24 = sadd.s32 %s23, 1
      %s25 = scalar_select %p22, %s23, %s24
      %p28 = pneg %p22
      %p29 = scmp.eq.s32.totalorder %s13, 3
      %p30 = por %p28, %p29
      %p31 = scmp.ne.s32.totalorder %s23, %s26
      %p32 = scmp.eq.s32.totalorder %s13, 0
      %p33 = por %p31, %p32
      %p34 = scmp.ne.s32.totalorder %s23, %s26
      %p35 = scmp.eq.s32.totalorder %s18, 3
      %p36 = por %p34, %p35
      %p37 = scmp.ne.s32.totalorder %s26, %s27
      %p38 = scmp.eq.s32.totalorder %s18, 0
      %p39 = por %p37, %p38
      %p40 = scmp.ne.s32.totalorder %s26, %s27
      %p41 = scmp.eq.s32.totalorder %s19, 3
      %p42 = por %p40, %p41
      %p44 = scmp.ne.s32.totalorder %s27, %s43
      %p45 = scmp.eq.s32.totalorder %s19, 0
      %p46 = por %p44, %p45
      %s47 = ssub.s32 %s13, %s20
      %p48 = scmp.eq.s32.totalorder %s47, 0
      %s50 = sadd.s32 %s49, 1
      %s51 = scalar_select %p48, %s49, %s50
      %p54 = pneg %p48
      %p55 = scmp.eq.s32.totalorder %s13, 3
      %p56 = por %p54, %p55
      %p57 = scmp.ne.s32.totalorder %s49, %s52
      %p58 = scmp.eq.s32.totalorder %s13, 0
      %p59 = por %p57, %p58
      %p60 = scmp.ne.s32.totalorder %s49, %s52
      %p61 = scmp.eq.s32.totalorder %s18, 3
      %p62 = por %p60, %p61
      %p63 = scmp.ne.s32.totalorder %s52, %s53
      %p64 = scmp.eq.s32.totalorder %s18, 0
      %p65 = por %p63, %p64
      %p66 = scmp.ne.s32.totalorder %s52, %s53
      %p67 = scmp.eq.s32.totalorder %s19, 3
      %p68 = por %p66, %p67
      %p70 = scmp.ne.s32.totalorder %s53, %s69
      %p71 = scmp.eq.s32.totalorder %s19, 0
      %p72 = por %p70, %p71
      %p73 = scmp.le.s32.totalorder 1, %s13
      %p74 = scmp.lt.s32.totalorder %s13, 5
      %p75 = pnand %p73, %p74
      %p76 = pneg %p75
      // Predicated region
      $region9: #{tpu_custom_call.1} parent=5 // pred_check
        _
      $region10: #{tpu_custom_call.1} parent=5 // pred_check_branch
        %78 = sbr.rel (%p75) target = $region12
      $region11: #{tpu_custom_call.1} parent=5 // pred_region
        %s79 = ssub.s32 %s13, 1
      $region12: #{tpu_custom_call.1} parent=5 // pred_fallthru
        _
      %p80 = scmp.lt.s32.totalorder %s13, 4
      // Predicated region
      $region13: #{tpu_custom_call.1} parent=5 // pred_check
        %p81 = pneg %p80
      $region14: #{tpu_custom_call.1} parent=5 // pred_check_branch
        %83 = sbr.rel (%p81) target = $region16
      $region15: #{tpu_custom_call.1} parent=5 // pred_region
        // Predicated region
        $region17: #{tpu_custom_call.1} parent=15 // pred_check
          %p84 = pneg %p33
        $region18: #{tpu_custom_call.1} parent=15 // pred_check_branch
          %86 = sbr.rel (%p84) target = $region20
        $region19: #{tpu_custom_call.1} parent=15 // pred_region
          %s87 = sand.u32 %s23, 1
          %s88 = scalar_lea.sflag [#allocation3], %s87
          %s89 = sand.u32 %s23, 1
          %s90 = smul.addr %s89, 32
          %s91 = scalar_lea.vmem [#allocation2], %s90
          %s92 = smul.u32 4, %s13
          %s94 = ssub.s32 512, 512
          %95 = vsyncadd %s88, %s94
          %s96 = smul.addr %s92, 128
          %s97 = scalar_lea.hbm %s0, %s96
          %s99 = sshll.u32 %s91, 4
          %s100 = int_to_ptr.vmem [resolvable:$true] %s99
          %102 = dma.hbm_to_vmem [thread:$0]  %s97, 512, %s100, %s88
        $region20: #{tpu_custom_call.1} parent=15 // pred_fallthru
          _
      $region16: #{tpu_custom_call.1} parent=5 // pred_fallthru
        _
      %p103 = scmp.le.s32.totalorder 1, %s13
      %p104 = scmp.lt.s32.totalorder %s13, 5
      %p105 = pnand %p103, %p104
      %p106 = pneg %p105
      // Predicated region
      $region21: #{tpu_custom_call.1} parent=5 // pred_check
        _
      $region22: #{tpu_custom_call.1} parent=5 // pred_check_branch
        %108 = sbr.rel (%p105) target = $region24
      $region23: #{tpu_custom_call.1} parent=5 // pred_region
        %s109 = ssub.s32 %s13, 1
        %s110 = sand.u32 %s26, 1
        %s111 = scalar_lea.sflag [#allocation3], %s110
        %s112 = sand.u32 %s26, 1
        %s113 = smul.addr %s112, 32
        %s114 = scalar_lea.vmem [#allocation2], %s113
        // Predicated region
        $region25: #{tpu_custom_call.1} parent=23 // pred_check
          %p115 = pneg %p39
        $region26: #{tpu_custom_call.1} parent=23 // pred_check_branch
          %117 = sbr.rel (%p115) target = $region28
        $region27: #{tpu_custom_call.1} parent=23 // pred_region
          %118 = dma.done %s111, 512
        $region28: #{tpu_custom_call.1} parent=23 // pred_fallthru
          _
        %s119 = sand.u32 %s26, 1
        %s120 = scalar_lea.sflag [#allocation3], %s119
        %s121 = sand.u32 %s26, 1
        %s122 = smul.addr %s121, 32
        %s123 = scalar_lea.vmem [#allocation2], %s122
        %p124 = pneg %p39
        %p125 = pneg %p36
        %p126 = pneg %p65
        %p127 = pneg %p62
        %s128 = sand.u32 %s52, 1
        %s129 = scalar_lea.sflag [#allocation4], %s128
        %s130 = sand.u32 %s52, 1
        %s131 = smul.addr %s130, 4
        %s132 = scalar_lea.vmem [#allocation5], %s131
        %s133 = smul.u32 4, %s18
        %s134 = smul.u32 4, %s18
        %v135 = vld [vmem:[%s114] sm:$0x7]
        %v136 = vld [vmem:[%s114 + $0x8] sm:$0x7]
        %v137 = vld [vmem:[%s114 + $0x10] sm:$0x7]
        %v138 = vld [vmem:[%s114 + $0x18] sm:$0x7]
        %v139 = vld [vmem:[%s114] sm:$0x38]
        %v140 = vld [vmem:[%s114 + $0x8] sm:$0x38]
        %v141 = vld [vmem:[%s114 + $0x10] sm:$0x38]
        %v142 = vld [vmem:[%s114 + $0x18] sm:$0x38]
        %v147 = vrot.slane %v139, 4
        %v148 = vrot.slane %v140, 4
        %v149 = vrot.slane %v141, 4
        %v150 = vrot.slane %v142, 4
        %v155 = vmul.f32 %v135, %v147
        %v156 = vmul.f32 %v136, %v148
        %v157 = vmul.f32 %v137, %v149
        %v158 = vmul.f32 %v138, %v150
        %v159 = vrot.slane %v139, 2
        %v160 = vrot.slane %v140, 2
        %v161 = vrot.slane %v141, 2
        %v162 = vrot.slane %v142, 2
        %v167 = vmul.f32 %v135, %v159
        %v168 = vmul.f32 %v136, %v160
        %v169 = vmul.f32 %v137, %v161
        %v170 = vmul.f32 %v138, %v162
        %v175 = vrot.slane %v167, 1
        %v176 = vrot.slane %v168, 1
        %v177 = vrot.slane %v169, 1
        %v178 = vrot.slane %v170, 1
        %v183 = vsub.f32 %v155, %v175
        %v184 = vsub.f32 %v156, %v176
        %v185 = vsub.f32 %v157, %v177
        %v186 = vsub.f32 %v158, %v178
        %v187 = vrot.slane %v139, 1
        %v188 = vrot.slane %v140, 1
        %v189 = vrot.slane %v141, 1
        %v190 = vrot.slane %v142, 1
        %v195 = vmul.f32 %v135, %v187
        %v196 = vmul.f32 %v136, %v188
        %v197 = vmul.f32 %v137, %v189
        %v198 = vmul.f32 %v138, %v190
        %v199 = vrot.slane %v139, 5
        %v200 = vrot.slane %v140, 5
        %v201 = vrot.slane %v141, 5
        %v202 = vrot.slane %v142, 5
        %v207 = vmul.f32 %v135, %v199
        %v208 = vmul.f32 %v136, %v200
        %v209 = vmul.f32 %v137, %v201
        %v210 = vmul.f32 %v138, %v202
        %v215 = vrot.slane %v207, 6
        %v216 = vrot.slane %v208, 6
        %v217 = vrot.slane %v209, 6
        %v218 = vrot.slane %v210, 6
        %v223 = vsub.f32 %v195, %v215
        %v224 = vsub.f32 %v196, %v216
        %v225 = vsub.f32 %v197, %v217
        %v226 = vsub.f32 %v198, %v218
        %v227 = vmul.f32 %v183, %v183
        %v228 = vmul.f32 %v184, %v184
        %v229 = vmul.f32 %v185, %v185
        %v230 = vmul.f32 %v186, %v186
        %v231 = vmul.f32 %v223, %v223
        %v232 = vmul.f32 %v224, %v224
        %v233 = vmul.f32 %v225, %v225
        %v234 = vmul.f32 %v226, %v226
        %v239 = vrot.slane %v231, 1
        %v240 = vrot.slane %v232, 1
        %v241 = vrot.slane %v233, 1
        %v242 = vrot.slane %v234, 1
        %v247 = vadd.f32 %v227, %v239
        %v248 = vadd.f32 %v228, %v240
        %v249 = vadd.f32 %v229, %v241
        %v250 = vadd.f32 %v230, %v242
        %v255 = vrot.slane %v227, 7
        %v256 = vrot.slane %v228, 7
        %v257 = vrot.slane %v229, 7
        %v258 = vrot.slane %v230, 7
        %v263 = vadd.f32 %v247, %v255
        %v264 = vadd.f32 %v248, %v256
        %v265 = vadd.f32 %v249, %v257
        %v266 = vadd.f32 %v250, %v258
        %v267 = vrsqrt.pop %v263
        %v268 = vmul.f32 %v263, %v267
        %vm269 = vcmp.eq.f32.partialorder %v263, inf
        %v270 = vsel %vm269, %v263, %v268
        %vm271 = vcmp.eq.f32.partialorder %v263, 0.0
        %v272 = vand.u32 %v263, 2147483648
        %v273 = vsel %vm271, %v272, %v270
        %v274 = vrsqrt.pop %v264
        %v275 = vmul.f32 %v264, %v274
        %vm276 = vcmp.eq.f32.partialorder %v264, inf
        %v277 = vsel %vm276, %v264, %v275
        %vm278 = vcmp.eq.f32.partialorder %v264, 0.0
        %v279 = vand.u32 %v264, 2147483648
        %v280 = vsel %vm278, %v279, %v277
        %v281 = vrsqrt.pop %v265
        %v282 = vmul.f32 %v265, %v281
        %vm283 = vcmp.eq.f32.partialorder %v265, inf
        %v284 = vsel %vm283, %v265, %v282
        %vm285 = vcmp.eq.f32.partialorder %v265, 0.0
        %v286 = vand.u32 %v265, 2147483648
        %v287 = vsel %vm285, %v286, %v284
        %v288 = vrsqrt.pop %v266
        %v289 = vmul.f32 %v266, %v288
        %vm290 = vcmp.eq.f32.partialorder %v266, inf
        %v291 = vsel %vm290, %v266, %v289
        %vm292 = vcmp.eq.f32.partialorder %v266, 0.0
        %v293 = vand.u32 %v266, 2147483648
        %v294 = vsel %vm292, %v293, %v291
        %v295 = vmul.f32 %v273, 0.5
        %v296 = vmul.f32 %v280, 0.5
        %v297 = vmul.f32 %v287, 0.5
        %v298 = vmul.f32 %v294, 0.5
        %v299 = vmul.f32 %v295, 0.06674
        %v300 = vmul.f32 %v296, 0.06674
        %v301 = vmul.f32 %v297, 0.06674
        %v302 = vmul.f32 %v298, 0.06674
        %v307 = vcombine.low %v299, %v300
        %v308 = vcombine.low %v301, %v302
        %v310 = vunpack.c.l.s4 1966171168
        %v311 = vunpack.c.0.s8 %v310
        %v312 = vlaneseq
        %v313 = vshrl.u32 %v312, 7
        %v314 = vsub.s32 %v311, %v313
        %v315 = vrot.slane %v307, %v314
        %v317 = vunpack.c.l.s4 1966171168
        %v318 = vunpack.c.0.s8 %v317
        %v319 = vlaneseq
        %v320 = vshrl.u32 %v319, 7
        %v321 = vsub.s32 %v318, %v320
        %v322 = vrot.slane %v308, %v321
        %v323 = vcombine.high %v315, %v322
        %v325 = vunpack.c.l.s4 1966171168
        %v326 = vunpack.c.0.s8 %v325
        %v327 = vlaneseq
        %v328 = vshrl.u32 %v327, 7
        %v329 = vsub.s32 %v326, %v328
        %v330 = vrot.slane %v323, %v329
        %v332 = vlaneseq
        %vm333 = vcmp.ge.s32.totalorder %v332, 0
        %vm334 = vcmp.lt.s32.totalorder %v332, 512
        %vm335 = vmand %vm333, %vm334
        %336 = vst.msk [vmem:[%s132] sm:$0xf] %vm335, %v330
        %s337 = sand.u32 %s52, 1
        %s338 = scalar_lea.sflag [#allocation4], %s337
        %s339 = sand.u32 %s52, 1
        %s340 = smul.addr %s339, 4
        %s341 = scalar_lea.vmem [#allocation5], %s340
        // Predicated region
        $region29: #{tpu_custom_call.1} parent=23 // pred_check
          %p342 = pneg %p62
        $region30: #{tpu_custom_call.1} parent=23 // pred_check_branch
          %344 = sbr.rel (%p342) target = $region32
        $region31: #{tpu_custom_call.1} parent=23 // pred_region
          %s345 = smul.u32 4, %s18
          %s347 = ssub.s32 64, 64
          %348 = vsyncadd %s338, %s347
          %s349 = smul.addr %s345, 16
          %s350 = scalar_lea.hbm %s1, %s349
          %s352 = sshll.u32 %s341, 4
          %s353 = int_to_ptr.vmem [resolvable:$true] %s352
          %355 = dma.vmem_to_hbm [thread:$0]  %s353, 64, %s350, %s338
        $region32: #{tpu_custom_call.1} parent=23 // pred_fallthru
          _
      $region24: #{tpu_custom_call.1} parent=5 // pred_fallthru
        _
      %p356 = scmp.le.s32.totalorder 2, %s13
      // Predicated region
      $region33: #{tpu_custom_call.1} parent=5 // pred_check
        %p357 = pneg %p356
      $region34: #{tpu_custom_call.1} parent=5 // pred_check_branch
        %359 = sbr.rel (%p357) target = $region36
      $region35: #{tpu_custom_call.1} parent=5 // pred_region
        %s360 = ssub.s32 %s13, 2
        // Predicated region
        $region37: #{tpu_custom_call.1} parent=35 // pred_check
          %p361 = pneg %p68
        $region38: #{tpu_custom_call.1} parent=35 // pred_check_branch
          %363 = sbr.rel (%p361) target = $region40
        $region39: #{tpu_custom_call.1} parent=35 // pred_region
          %s364 = sand.u32 %s53, 1
          %s365 = scalar_lea.sflag [#allocation4], %s364
          %s366 = sand.u32 %s53, 1
          %s367 = smul.addr %s366, 4
          %s368 = scalar_lea.vmem [#allocation5], %s367
          %369 = dma.done %s365, 64
        $region40: #{tpu_custom_call.1} parent=35 // pred_fallthru
          _
      $region36: #{tpu_custom_call.1} parent=5 // pred_fallthru
        _
    $region6: #{tpu_custom_call.1} parent=1 // loop_footer
      %s17 = sadd.s32 1, %s13
    $region7: #{tpu_custom_call.1} parent=1 // loop_footer_branch
      %12 = sbr.rel target = $region3
    $region8: #{tpu_custom_call.1} parent=1 // loop_exit
      _
    %370 = vsyncpa [#allocation3], 1
    %s371 = scalar_lea.sflag [#allocation3], 1
    %372 = vsyncpa %s371, 1
    %373 = vsyncpa [#allocation4], 1
    %s374 = scalar_lea.sflag [#allocation4], 1
    %375 = vsyncpa %s374, 1

</llo_original>
